<compile_context>
chip_gen: v6e
topology: v6e:2x2x1
jax: 0.10.0
libtpu: 0.0.40
codegen_flags: <defaults>
</compile_context>

<pallas_src>
import jax
import jax.numpy as jnp
from jax.experimental import pallas as pl
from jax.experimental.pallas import tpu as pltpu


K_IN = 3      # nn.Linear in_features
N_OUT = 5     # nn.Linear out_features
N_PAD = 8     # padded to a full sublane group


def linear_bias_kernel(w_ref, fb_ref, xT_ref, o_ref):
    """out_T = W @ x_T + fused_bias, batch on the lane axis.

    w_ref : (N_PAD, K)       resident weight (zero-padded rows 5..7)
    fb_ref: (N_PAD, 1)       fused (linear bias + extra bias)
    xT_ref: (K, tile_b)      x transposed so batch is lane-dense
    o_ref : (N_PAD, tile_b)  lane-dense output tile
    """
    k = xT_ref.shape[0]
    # K=3 contraction as statically-unrolled VPU broadcast-FMAs.  The (N_PAD,1)
    # and (1,tile_b) operands are consumed via broadcasting (replicated layouts),
    # never materialized with broadcast_to.
    acc = w_ref[:, 0:1] * xT_ref[0:1, :]
    for kk in range(1, k):
        acc = acc + w_ref[:, kk:kk + 1] * xT_ref[kk:kk + 1, :]
    acc = acc + fb_ref[...]
    o_ref[...] = acc.astype(o_ref.dtype)


def prepare_params(weight, lin_bias, bias):
    """One-time parameter prep: fuse the two biases and pad N 5 -> 8.

    `bias` must be per-feature (shape (5,) or (1,5)), as in the reference
    module; a per-row bias cannot be fused this way.
    """
    weight = jnp.asarray(weight, dtype=jnp.float32)
    lin_bias = jnp.asarray(lin_bias, dtype=jnp.float32)
    bias = jnp.asarray(bias, dtype=jnp.float32)
    if bias.size != N_OUT:
        raise ValueError(
            "extra bias must be per-feature with %d elements, got shape %s"
            % (N_OUT, bias.shape))
    fused = lin_bias.reshape(N_OUT) + bias.reshape(N_OUT)

    w8 = jnp.zeros((N_PAD, K_IN), jnp.float32).at[:N_OUT, :].set(weight)
    fb8 = jnp.zeros((N_PAD, 1), jnp.float32).at[:N_OUT, 0].set(fused)
    return w8, fb8


def _round_up(x, m):
    return ((x + m - 1) // m) * m


def _pick_tile_b(batch, tile_b=None, max_tile=32768):
    """Lane-axis batch tile: as large as possible for bandwidth, but keep the
    grid >= 2 steps (v7x has 2 TensorCores) and always a multiple of 128."""
    if tile_b is not None:
        if tile_b % 128 != 0:
            raise ValueError("tile_b must be a multiple of 128, got %d" % tile_b)
        return tile_b
    p_b = _round_up(batch, 128)
    t = min(max_tile, _round_up(pl.cdiv(p_b, 2), 128))
    return max(t, 128)


def model_forward_lane_major(xT, w8, fb8, *, tile_b=None):
    """Primary path (no wrapper HBM passes).

    xT : (K, B) f32, batch on lanes.
    Returns (N_PAD, B) f32; rows 0..4 are the real output features.
    """
    k, batch = xT.shape
    tb = _pick_tile_b(batch, tile_b)
    grid = (pl.cdiv(batch, tb),)   # partial edge block; no padding / round-up

    return pl.pallas_call(
        linear_bias_kernel,
        out_shape=jax.ShapeDtypeStruct((N_PAD, batch), jnp.float32),
        grid=grid,
        in_specs=[
            pl.BlockSpec((N_PAD, k), lambda i: (0, 0)),   # weight, resident
            pl.BlockSpec((N_PAD, 1), lambda i: (0, 0)),   # fused bias, resident
            pl.BlockSpec((k, tb), lambda i: (0, i)),      # x_T tile, double-buffered
        ],
        out_specs=pl.BlockSpec((N_PAD, tb), lambda i: (0, i)),
        compiler_params=pltpu.CompilerParams(
            dimension_semantics=("parallel",),            # shard batch tiles across TCs (v7x)
        ),
    )(w8, fb8, xT)


def model_forward(x, w8, fb8, *, tile_b=None):
    """PyTorch-compatible interface: x (B, K) f32 -> (B, N_OUT) f32.

    The x.T / out.T here are pure layout glue for API parity with the original
    module; they are extra HBM passes.  In a real pipeline keep activations in
    the lane-major (K, B)/(N_PAD, B) layout and call model_forward_lane_major
    directly (or fold the de-transpose into the downstream consumer).
    """
    out_t = model_forward_lane_major(x.T, w8, fb8, tile_b=tile_b)
    return out_t[:N_OUT, :].T


if __name__ == "__main__":
    key = jax.random.PRNGKey(0)
    k_x, k_w, k_b, k_bias = jax.random.split(key, 4)

    batch = 300                      # not a multiple of 128 -> partial edge block + 2-step grid
    x = jax.random.normal(k_x, (batch, K_IN), dtype=jnp.float32)
    weight = jax.random.normal(k_w, (N_OUT, K_IN), dtype=jnp.float32)
    lin_bias = jax.random.normal(k_b, (N_OUT,), dtype=jnp.float32)
    bias = jax.random.normal(k_bias, (1, N_OUT), dtype=jnp.float32)

    # One-time parameter prep (bias fusion + N padding), off the per-call path.
    w8, fb8 = prepare_params(weight, lin_bias, bias)

    # Reference in plain JAX.
    ref = x @ weight.T + lin_bias[None, :] + bias

    # 1) Recommended lane-major path (the transpose below is test-harness layout
    #    prep; real callers keep activations lane-major end-to-end).
    out_t = model_forward_lane_major(jnp.asarray(x.T), w8, fb8)
    jax.block_until_ready(out_t)
    assert out_t.shape == (N_PAD, batch)
    assert jnp.allclose(out_t[:N_OUT, :].T, ref, atol=1e-5, rtol=1e-5)

    # 2) PyTorch-compatible wrapper (same kernel, plus layout glue).
    out = model_forward(x, w8, fb8)
    jax.block_until_ready(out)
    assert out.shape == (batch, N_OUT)
    assert jnp.allclose(out, ref, atol=1e-5, rtol=1e-5)

    print("KERNEL_OK")
</pallas_src>

<mosaic_0001>
module attributes {stable_mosaic.version = 11 : i64} {
  func.func @linear_bias_kernel(%arg0: i32, %arg1: memref<8x3xf32, #tpu.memory_space<vmem>>, %arg2: memref<8x1xf32, #tpu.memory_space<vmem>>, %arg3: memref<3x256xf32, #tpu.memory_space<vmem>>, %arg4: memref<8x256xf32, #tpu.memory_space<vmem>>) attributes {dimension_semantics = [#tpu.dimension_semantics<parallel>], iteration_bounds = array<i64: 2>, scalar_prefetch = 0 : i64, scratch_operands = 0 : i64, tpu.core_type = #tpu.core_type<tc>, window_params = [{pipeline_mode = #tpu.pipeline_mode<synchronous>, transform_indices = @transform_0, window_bounds = array<i64: 8, 3>}, {pipeline_mode = #tpu.pipeline_mode<synchronous>, transform_indices = @transform_1, window_bounds = array<i64: 8, 1>}, {transform_indices = @transform_2, window_bounds = array<i64: 3, 256>}, {transform_indices = @transform_3, window_bounds = array<i64: 8, 256>}]} {
    %c0 = arith.constant 0 : index
    %c0_0 = arith.constant 0 : index
    %0 = vector.load %arg1[%c0, %c0_0] : memref<8x3xf32, #tpu.memory_space<vmem>>, vector<8x1xf32>
    %c0_1 = arith.constant 0 : index
    %c0_2 = arith.constant 0 : index
    %1 = vector.load %arg3[%c0_1, %c0_2] : memref<3x256xf32, #tpu.memory_space<vmem>>, vector<1x256xf32>
    %2 = vector.broadcast %0 : vector<8x1xf32> to vector<8x256xf32>
    %3 = vector.broadcast %1 : vector<1x256xf32> to vector<8x256xf32>
    %4 = arith.mulf %2, %3 : vector<8x256xf32>
    %c0_3 = arith.constant 0 : index
    %c1 = arith.constant 1 : index
    %5 = vector.load %arg1[%c0_3, %c1] : memref<8x3xf32, #tpu.memory_space<vmem>>, vector<8x1xf32>
    %c1_4 = arith.constant 1 : index
    %c0_5 = arith.constant 0 : index
    %6 = vector.load %arg3[%c1_4, %c0_5] : memref<3x256xf32, #tpu.memory_space<vmem>>, vector<1x256xf32>
    %7 = vector.broadcast %5 : vector<8x1xf32> to vector<8x256xf32>
    %8 = vector.broadcast %6 : vector<1x256xf32> to vector<8x256xf32>
    %9 = arith.mulf %7, %8 : vector<8x256xf32>
    %10 = arith.addf %4, %9 : vector<8x256xf32>
    %c0_6 = arith.constant 0 : index
    %c2 = arith.constant 2 : index
    %11 = vector.load %arg1[%c0_6, %c2] : memref<8x3xf32, #tpu.memory_space<vmem>>, vector<8x1xf32>
    %c2_7 = arith.constant 2 : index
    %c0_8 = arith.constant 0 : index
    %12 = vector.load %arg3[%c2_7, %c0_8] : memref<3x256xf32, #tpu.memory_space<vmem>>, vector<1x256xf32>
    %13 = vector.broadcast %11 : vector<8x1xf32> to vector<8x256xf32>
    %14 = vector.broadcast %12 : vector<1x256xf32> to vector<8x256xf32>
    %15 = arith.mulf %13, %14 : vector<8x256xf32>
    %16 = arith.addf %10, %15 : vector<8x256xf32>
    %c0_9 = arith.constant 0 : index
    %c0_10 = arith.constant 0 : index
    %17 = vector.load %arg2[%c0_9, %c0_10] : memref<8x1xf32, #tpu.memory_space<vmem>>, vector<8x1xf32>
    %18 = vector.broadcast %17 : vector<8x1xf32> to vector<8x256xf32>
    %19 = arith.addf %16, %18 : vector<8x256xf32>
    %c0_11 = arith.constant 0 : index
    %c0_12 = arith.constant 0 : index
    %20 = vector.load %arg4[%c0_11, %c0_12] : memref<8x256xf32, #tpu.memory_space<vmem>>, vector<8x256xf32>
    tpu.vector_store %arg4[%c0_11, %c0_12], %19 {strides = array<i32>} : memref<8x256xf32, #tpu.memory_space<vmem>>, vector<8x256xf32>,
    return
  }
  func.func @transform_0(%arg0: i32) -> (i32, i32) {
    %c0_i32 = arith.constant 0 : i32
    %c0_i32_0 = arith.constant 0 : i32
    %c0_i32_1 = arith.constant 0 : i32
    return %c0_i32, %c0_i32_0 : i32, i32
  }
  func.func @transform_1(%arg0: i32) -> (i32, i32) {
    %c0_i32 = arith.constant 0 : i32
    %c0_i32_0 = arith.constant 0 : i32
    %c0_i32_1 = arith.constant 0 : i32
    return %c0_i32, %c0_i32_0 : i32, i32
  }
  func.func @transform_2(%arg0: i32) -> (i32, i32) {
    %c0_i32 = arith.constant 0 : i32
    %c0_i32_0 = arith.constant 0 : i32
    return %c0_i32, %arg0 : i32, i32
  }
  func.func @transform_3(%arg0: i32) -> (i32, i32) {
    %c0_i32 = arith.constant 0 : i32
    %c0_i32_0 = arith.constant 0 : i32
    return %c0_i32, %arg0 : i32, i32
  }
}

</mosaic_0001>

<llo_original>
// kernel: tpu_custom_call.1
$region0: #{tpu_custom_call.1}
  #allocation0 [shape = 'u32[]', space=smem, size = 0x4, offset = 0x4, fixed_abs, tag = 'smem constant byte address 0x4 - core index']
  #allocation1 [shape = 'u32[144,128]{1,0:T(1,128)}', space=vmem, size = 0x12000, scoped, tag = 'internal scratch']
  %s0 = inlined_call_operand.vmem [shape: f32[8,3], index: 0, kind: input, shape index: {}]
  %s1 = inlined_call_operand.vmem [shape: f32[8,1], index: 1, kind: input, shape index: {}]
  %s2 = inlined_call_operand.vmem [shape: f32[3,300], index: 2, kind: input, shape index: {}]
  %s3 = inlined_call_operand.hbm [shape: f32[8,300], index: 3, kind: output, shape index: {}]
  %s4 = sld [smem:[#allocation0]]
  $region45: #{tpu_custom_call.1} parent=0
    _
  %s6 = ssub.s32 1, %s4
  %s7 = scalar_select 0, %s6, %s4
  $region1: #{tpu_custom_call.1} parent=0
    #allocation2 [shape = 'u8[16384]{0}', space=vmem, size = 0x4000, scoped, tag = 'output window, operand 0']
    #allocation3 [shape = 's32[2]{0}', space=sflag, size = 0x8, scoped, tag = 'scoped memory for tpu_custom_call.1']
    %8 = vsyncpa [#allocation3], 0
    %s9 = scalar_lea.sflag [#allocation3], 1
    %10 = vsyncpa %s9, 0
    loop: start=0, step=1, limit=4
    $region2: #{tpu_custom_call.1} parent=1 // loop_pre_header
      _
    $region3: #{tpu_custom_call.1} parent=1 // loop_header
      %s12 = sphi 0, %s16
      %p13 = scmp.ge.s32.totalorder %s12, 4
      %s20 = sphi 0, %s20
      %s22 = sphi 0, %s20
      %s23 = sphi 0, %s22
      %s37 = sphi 0, %s23
      %s41 = sphi 0, %s41
      %s43 = sphi 0, %s41
      %s44 = sphi 0, %s43
      %s58 = sphi 0, %s44
      %s64 = sphi 0, %s66
      %s67 = sphi 0, %s64
      %s68 = sphi 0, %s67
      %s84 = sphi 0, %s68
      %s90 = sphi 0, %s92
      %s93 = sphi 0, %s90
      %s94 = sphi 0, %s93
      %s110 = sphi 0, %s94
    $region4: #{tpu_custom_call.1} parent=1 // loop_header_branch
      %15 = sbr.rel (%p13) target = $region8
    $region5: #{tpu_custom_call.1} parent=1 // loop_body
      %s17 = ssub.s32 %s12, 1
      %s18 = ssub.s32 %s12, 2
      %s19 = sadd.s32 %s12, 1
      %s21 = sadd.s32 %s20, 1
      %p24 = scmp.eq.s32.totalorder %s12, 1
      %p25 = scmp.ne.s32.totalorder %s20, %s22
      %p26 = scmp.eq.s32.totalorder %s12, 0
      %p27 = por %p25, %p26
      %p28 = scmp.ne.s32.totalorder %s20, %s22
      %p29 = scmp.eq.s32.totalorder %s17, 1
      %p30 = por %p28, %p29
      %p31 = scmp.ne.s32.totalorder %s22, %s23
      %p32 = scmp.eq.s32.totalorder %s17, 0
      %p33 = por %p31, %p32
      %p34 = scmp.ne.s32.totalorder %s22, %s23
      %p35 = scmp.eq.s32.totalorder %s18, 1
      %p36 = por %p34, %p35
      %p38 = scmp.ne.s32.totalorder %s23, %s37
      %p39 = scmp.eq.s32.totalorder %s18, 0
      %p40 = por %p38, %p39
      %s42 = sadd.s32 %s41, 1
      %p45 = scmp.eq.s32.totalorder %s12, 1
      %p46 = scmp.ne.s32.totalorder %s41, %s43
      %p47 = scmp.eq.s32.totalorder %s12, 0
      %p48 = por %p46, %p47
      %p49 = scmp.ne.s32.totalorder %s41, %s43
      %p50 = scmp.eq.s32.totalorder %s17, 1
      %p51 = por %p49, %p50
      %p52 = scmp.ne.s32.totalorder %s43, %s44
      %p53 = scmp.eq.s32.totalorder %s17, 0
      %p54 = por %p52, %p53
      %p55 = scmp.ne.s32.totalorder %s43, %s44
      %p56 = scmp.eq.s32.totalorder %s18, 1
      %p57 = por %p55, %p56
      %p59 = scmp.ne.s32.totalorder %s44, %s58
      %p60 = scmp.eq.s32.totalorder %s18, 0
      %p61 = por %p59, %p60
      %s62 = ssub.s32 %s12, %s19
      %p63 = scmp.eq.s32.totalorder %s62, 0
      %s65 = sadd.s32 %s64, 1
      %s66 = scalar_select %p63, %s64, %s65
      %p69 = pneg %p63
      %p70 = scmp.eq.s32.totalorder %s12, 1
      %p71 = por %p69, %p70
      %p72 = scmp.ne.s32.totalorder %s64, %s67
      %p73 = scmp.eq.s32.totalorder %s12, 0
      %p74 = por %p72, %p73
      %p75 = scmp.ne.s32.totalorder %s64, %s67
      %p76 = scmp.eq.s32.totalorder %s17, 1
      %p77 = por %p75, %p76
      %p78 = scmp.ne.s32.totalorder %s67, %s68
      %p79 = scmp.eq.s32.totalorder %s17, 0
      %p80 = por %p78, %p79
      %p81 = scmp.ne.s32.totalorder %s67, %s68
      %p82 = scmp.eq.s32.totalorder %s18, 1
      %p83 = por %p81, %p82
      %p85 = scmp.ne.s32.totalorder %s68, %s84
      %p86 = scmp.eq.s32.totalorder %s18, 0
      %p87 = por %p85, %p86
      %s88 = ssub.s32 %s12, %s19
      %p89 = scmp.eq.s32.totalorder %s88, 0
      %s91 = sadd.s32 %s90, 1
      %s92 = scalar_select %p89, %s90, %s91
      %p95 = pneg %p89
      %p96 = scmp.eq.s32.totalorder %s12, 1
      %p97 = por %p95, %p96
      %p98 = scmp.ne.s32.totalorder %s90, %s93
      %p99 = scmp.eq.s32.totalorder %s12, 0
      %p100 = por %p98, %p99
      %p101 = scmp.ne.s32.totalorder %s90, %s93
      %p102 = scmp.eq.s32.totalorder %s17, 1
      %p103 = por %p101, %p102
      %p104 = scmp.ne.s32.totalorder %s93, %s94
      %p105 = scmp.eq.s32.totalorder %s17, 0
      %p106 = por %p104, %p105
      %p107 = scmp.ne.s32.totalorder %s93, %s94
      %p108 = scmp.eq.s32.totalorder %s18, 1
      %p109 = por %p107, %p108
      %p111 = scmp.ne.s32.totalorder %s94, %s110
      %p112 = scmp.eq.s32.totalorder %s18, 0
      %p113 = por %p111, %p112
      %p114 = scmp.le.s32.totalorder 1, %s12
      %p115 = scmp.lt.s32.totalorder %s12, 3
      %p116 = pnand %p114, %p115
      %p117 = pneg %p116
      // Predicated region
      $region9: #{tpu_custom_call.1} parent=5 // pred_check
        _
      $region10: #{tpu_custom_call.1} parent=5 // pred_check_branch
        %119 = sbr.rel (%p116) target = $region12
      $region11: #{tpu_custom_call.1} parent=5 // pred_region
        %s120 = ssub.s32 %s12, 1
        // Predicated region
        $region13: #{tpu_custom_call.1} parent=11 // pred_check
          %p121 = pneg %p33
        $region14: #{tpu_custom_call.1} parent=11 // pred_check_branch
          %123 = sbr.rel (%p121) target = $region16
        $region15: #{tpu_custom_call.1} parent=11 // pred_region
          _
        $region16: #{tpu_custom_call.1} parent=11 // pred_fallthru
          _
        // Predicated region
        $region17: #{tpu_custom_call.1} parent=11 // pred_check
          %p124 = pneg %p54
        $region18: #{tpu_custom_call.1} parent=11 // pred_check_branch
          %126 = sbr.rel (%p124) target = $region20
        $region19: #{tpu_custom_call.1} parent=11 // pred_region
          _
        $region20: #{tpu_custom_call.1} parent=11 // pred_fallthru
          _
      $region12: #{tpu_custom_call.1} parent=5 // pred_fallthru
        _
      %p127 = scmp.lt.s32.totalorder %s12, 2
      // Predicated region
      $region21: #{tpu_custom_call.1} parent=5 // pred_check
        %p128 = pneg %p127
      $region22: #{tpu_custom_call.1} parent=5 // pred_check_branch
        %130 = sbr.rel (%p128) target = $region24
      $region23: #{tpu_custom_call.1} parent=5 // pred_region
        // Predicated region
        $region25: #{tpu_custom_call.1} parent=23 // pred_check
          %p131 = pneg %p74
        $region26: #{tpu_custom_call.1} parent=23 // pred_check_branch
          %133 = sbr.rel (%p131) target = $region28
        $region27: #{tpu_custom_call.1} parent=23 // pred_region
          %s134 = smul.u32 2, %s12
          %s135 = ssub.s32 3, %s134
          %p136 = scmp.lt.s32.totalorder %s135, 2
          %s137 = scalar_select %p136, %s135, 2
          %s138 = smul.u32 64, %s137
          %p139 = scmp.lt.s32.totalorder %s134, 2
          %s140 = scalar_select %p139, %s134, 2
          %s141 = smul.addr %s140, 4
          %s142 = scalar_lea.vmem %s2, %s141
          %s143 = smul.u32 2, %s12
          %s144 = ssub.s32 3, %s143
          %p145 = scmp.lt.s32.totalorder %s144, 2
          %s146 = scalar_select %p145, %s144, 2
          %s147 = smul.u32 64, %s146
        $region28: #{tpu_custom_call.1} parent=23 // pred_fallthru
          _
      $region24: #{tpu_custom_call.1} parent=5 // pred_fallthru
        _
      %p148 = scmp.le.s32.totalorder 1, %s12
      %p149 = scmp.lt.s32.totalorder %s12, 3
      %p150 = pnand %p148, %p149
      %p151 = pneg %p150
      // Predicated region
      $region29: #{tpu_custom_call.1} parent=5 // pred_check
        _
      $region30: #{tpu_custom_call.1} parent=5 // pred_check_branch
        %153 = sbr.rel (%p150) target = $region32
      $region31: #{tpu_custom_call.1} parent=5 // pred_region
        %s154 = ssub.s32 %s12, 1
        %p155 = pneg %p33
        %p156 = pneg %p30
        %p157 = pneg %p54
        %p158 = pneg %p51
        %s159 = smul.u32 2, %s17
        %s160 = ssub.s32 3, %s159
        %p161 = scmp.lt.s32.totalorder %s160, 2
        %s162 = scalar_select %p161, %s160, 2
        %s163 = smul.u32 64, %s162
        %p164 = scmp.lt.s32.totalorder %s159, 2
        %s165 = scalar_select %p164, %s159, 2
        %s166 = smul.addr %s165, 4
        %s167 = scalar_lea.vmem %s2, %s166
        %p168 = pneg %p80
        %p169 = pneg %p77
        %p170 = pneg %p106
        %p171 = pneg %p103
        %s172 = sand.u32 %s93, 1
        %s173 = scalar_lea.sflag [#allocation3], %s172
        %s174 = sand.u32 %s93, 1
        %s175 = smul.addr %s174, 16
        %s176 = scalar_lea.vmem [#allocation2], %s175
        %s177 = smul.u32 2, %s17
        %s178 = ssub.s32 3, %s177
        %p179 = scmp.lt.s32.totalorder %s178, 2
        %s180 = scalar_select %p179, %s178, 2
        %s181 = smul.u32 64, %s180
        %p182 = scmp.lt.s32.totalorder %s177, 2
        %s183 = scalar_select %p182, %s177, 2
        %s184 = smul.addr %s183, 4
        %s185 = scalar_lea.vmem %s2, %s184
        %s186 = smul.u32 2, %s17
        %s187 = ssub.s32 3, %s186
        %p188 = scmp.lt.s32.totalorder %s187, 2
        %s189 = scalar_select %p188, %s187, 2
        %s190 = smul.u32 64, %s189
        %s191 = smul.u32 2, %s17
        %s192 = ssub.s32 3, %s191
        %p193 = scmp.lt.s32.totalorder %s192, 2
        %s194 = scalar_select %p193, %s192, 2
        %s195 = smul.u32 128, %s194
        %v196 = vld [vmem:[%s0] sm:$0xff]
        %v197 = vld [vmem:[%s185] ss:$4 sm:$0x3]
        %199 = vset.pattern.permute.xlu0 0
        %200 = vperm.xlu0 %199, %v196
        %v201 = vpop.permute.xlu0 %200
        %v204 = vlaneseq
        %v205 = vshrl.u32 %v204, 7
        %v206 = vsub.s32 0, %v205
        %v207 = vrot.slane %v197, %v206
        %v208 = vlaneseq
        %v209 = vshrl.u32 %v208, 7
        %v210 = vsub.s32 1, %v209
        %v211 = vrot.slane %v197, %v210
        %v214 = vmul.f32 %v201, %v207
        %v215 = vmul.f32 %v201, %v211
        %s216 = scalar_lea.vmem %s185, 1
        %v217 = vld [vmem:[%s216] ss:$4 sm:$0x3]
        %218 = vset.pattern.permute.xlu0 1
        %219 = vperm.xlu0 %218, %v196
        %v220 = vpop.permute.xlu0 %219
        %v223 = vlaneseq
        %v224 = vshrl.u32 %v223, 7
        %v225 = vsub.s32 0, %v224
        %v226 = vrot.slane %v217, %v225
        %v227 = vlaneseq
        %v228 = vshrl.u32 %v227, 7
        %v229 = vsub.s32 1, %v228
        %v230 = vrot.slane %v217, %v229
        %v233 = vmul.f32 %v220, %v226
        %v234 = vmul.f32 %v220, %v230
        %v235 = vadd.f32 %v214, %v233
        %v236 = vadd.f32 %v215, %v234
        %s237 = scalar_lea.vmem %s185, 2
        %v238 = vld [vmem:[%s237] ss:$4 sm:$0x3]
        %239 = vset.pattern.permute.xlu0 2
        %240 = vperm.xlu0 %239, %v196
        %v241 = vpop.permute.xlu0 %240
        %v244 = vlaneseq
        %v245 = vshrl.u32 %v244, 7
        %v246 = vsub.s32 0, %v245
        %v247 = vrot.slane %v238, %v246
        %v248 = vlaneseq
        %v249 = vshrl.u32 %v248, 7
        %v250 = vsub.s32 1, %v249
        %v251 = vrot.slane %v238, %v250
        %v254 = vmul.f32 %v241, %v247
        %v255 = vmul.f32 %v241, %v251
        %v256 = vadd.f32 %v235, %v254
        %v257 = vadd.f32 %v236, %v255
        %v258 = vld [vmem:[%s1] sm:$0xff]
        %260 = vset.pattern.permute.xlu0 0
        %261 = vperm.xlu0 %260, %v258
        %v262 = vpop.permute.xlu0 %261
        %v264 = vadd.f32 %v256, %v262
        %v265 = vadd.f32 %v257, %v262
        %266 = vst [vmem:[%s176] sm:$0xff] %v264
        %267 = vst [vmem:[%s176 + $0x8] sm:$0xff] %v265
        %s268 = sand.u32 %s93, 1
        %s269 = scalar_lea.sflag [#allocation3], %s268
        %s270 = sand.u32 %s93, 1
        %s271 = smul.addr %s270, 16
        %s272 = scalar_lea.vmem [#allocation2], %s271
        // Predicated region
        $region33: #{tpu_custom_call.1} parent=31 // pred_check
          %p273 = pneg %p103
        $region34: #{tpu_custom_call.1} parent=31 // pred_check_branch
          %275 = sbr.rel (%p273) target = $region36
        $region35: #{tpu_custom_call.1} parent=31 // pred_region
          %s276 = smul.u32 2, %s17
          %s277 = ssub.s32 3, %s276
          %p278 = scmp.lt.s32.totalorder %s277, 2
          %s279 = scalar_select %p278, %s277, 2
          %s280 = smul.u32 128, %s279
          %s282 = ssub.s32 256, %s280
          %283 = vsyncadd %s269, %s282
          %p284 = scmp.ne.s32.totalorder 0, %s280
          %s285 = smul.addr %s276, 128
          %s286 = scalar_lea.hbm %s3, %s285
          %s287 = smul.u32 %s279, 8
          %s288 = sshll.u32 %s287, 4
          %s289 = sshll.u32 %s272, 4
          %s290 = int_to_ptr.vmem [resolvable:$true] %s289
          %292 = dma.vmem_to_hbm [thread:$0]  (%p284), %s290, %s288, %s286, %s269
        $region36: #{tpu_custom_call.1} parent=31 // pred_fallthru
          _
      $region32: #{tpu_custom_call.1} parent=5 // pred_fallthru
        _
      %p293 = scmp.le.s32.totalorder 2, %s12
      // Predicated region
      $region37: #{tpu_custom_call.1} parent=5 // pred_check
        %p294 = pneg %p293
      $region38: #{tpu_custom_call.1} parent=5 // pred_check_branch
        %296 = sbr.rel (%p294) target = $region40
      $region39: #{tpu_custom_call.1} parent=5 // pred_region
        %s297 = ssub.s32 %s12, 2
        // Predicated region
        $region41: #{tpu_custom_call.1} parent=39 // pred_check
          %p298 = pneg %p109
        $region42: #{tpu_custom_call.1} parent=39 // pred_check_branch
          %300 = sbr.rel (%p298) target = $region44
        $region43: #{tpu_custom_call.1} parent=39 // pred_region
          %s301 = sand.u32 %s94, 1
          %s302 = scalar_lea.sflag [#allocation3], %s301
          %s303 = sand.u32 %s94, 1
          %s304 = smul.addr %s303, 16
          %s305 = scalar_lea.vmem [#allocation2], %s304
          %306 = dma.done %s302, 256
        $region44: #{tpu_custom_call.1} parent=39 // pred_fallthru
          _
      $region40: #{tpu_custom_call.1} parent=5 // pred_fallthru
        _
    $region6: #{tpu_custom_call.1} parent=1 // loop_footer
      %s16 = sadd.s32 1, %s12
    $region7: #{tpu_custom_call.1} parent=1 // loop_footer_branch
      %11 = sbr.rel target = $region3
    $region8: #{tpu_custom_call.1} parent=1 // loop_exit
      _
    %307 = vsyncpa [#allocation3], 1
    %s308 = scalar_lea.sflag [#allocation3], 1
    %309 = vsyncpa %s308, 1

</llo_original>
